<compile_context>
chip_gen: v5e
topology: v5e:2x2
jax: 0.10.0
libtpu: 0.0.40
codegen_flags: <defaults>
</compile_context>

<pallas_src>
import functools

import jax
import jax.numpy as jnp
from jax.experimental import pallas as pl
from jax.experimental.pallas import tpu as pltpu

LANE = 128  # TPU lane width: every feature dimension is padded to this.


def _round_up(x, m):
    return (x + m - 1) // m * m


def qnet_kernel(x_ref, w_ref, b_ref, o_ref):
    """Fused 4-layer MLP for one batch tile.

    x_ref: [TB, 128]      bf16 activations (zero-padded features)
    w_ref: [4, 128, 128]  bf16 packed, padded weights (resident across grid)
    b_ref: [4, 1, 128]    f32  packed, padded biases  (resident across grid)
    o_ref: [TB, 128]      f32  lane-dense output (padded action dim)
    """
    h = x_ref[...]
    # Hidden layers: Linear + bias + ReLU; bf16 MXU operands, f32 accumulate.
    for layer in range(3):
        z = jnp.dot(h, w_ref[layer], preferred_element_type=jnp.float32)
        h = jnp.maximum(z + b_ref[layer], 0.0).astype(jnp.bfloat16)
    # Output layer: Linear + bias, no activation, stored lane-dense in f32.
    z = jnp.dot(h, w_ref[3], preferred_element_type=jnp.float32)
    o_ref[...] = (z + b_ref[3]).astype(o_ref.dtype)


def pack_qnet_params(params, param_dtype=jnp.bfloat16):
    """Pack [(W [in,out] f32, b [out] f32), ...] into 2 padded, typed buffers."""
    n_layers = len(params)
    w_packed = jnp.zeros((n_layers, LANE, LANE), param_dtype)
    b_packed = jnp.zeros((n_layers, 1, LANE), jnp.float32)
    for i, (w, b) in enumerate(params):
        fan_in, fan_out = w.shape
        w_packed = w_packed.at[i, :fan_in, :fan_out].set(w.astype(param_dtype))
        b_packed = b_packed.at[i, 0, :fan_out].set(
            b.reshape(-1).astype(jnp.float32))
    return w_packed, b_packed


@functools.partial(jax.jit, static_argnames=("action_size", "block_b"))
def qnet_forward(x, w_packed, b_packed, *, action_size, block_b=256):
    """x: [B, state_size] f32.  Returns [B, action_size] f32 Q-values."""
    B, S = x.shape
    assert S <= LANE, "state_size must fit in one lane group"
    n_layers = w_packed.shape[0]

    # Batch tile: at least a full sublane group, at most block_b rows.
    TB = min(block_b, _round_up(B, 8))
    B_pad = _round_up(B, TB)

    # Pad features to the lane width and batch to the tile size; cast to bf16.
    x_p = jnp.zeros((B_pad, LANE), w_packed.dtype)
    x_p = jax.lax.dynamic_update_slice(x_p, x.astype(w_packed.dtype), (0, 0))

    out_padded = pl.pallas_call(
        qnet_kernel,
        out_shape=jax.ShapeDtypeStruct((B_pad, LANE), jnp.float32),
        grid=(B_pad // TB,),
        in_specs=[
            # x: one batch tile per grid step.
            pl.BlockSpec((TB, LANE), lambda i: (i, 0)),
            # Packed params: constant block index -> DMA'd once, stay resident.
            pl.BlockSpec((n_layers, LANE, LANE), lambda i: (0, 0, 0)),
            pl.BlockSpec((n_layers, 1, LANE), lambda i: (0, 0, 0)),
        ],
        out_specs=pl.BlockSpec((TB, LANE), lambda i: (i, 0)),
        compiler_params=pltpu.CompilerParams(
            dimension_semantics=("parallel",)),
    )(x_p, w_packed, b_packed)

    return out_padded[:B, :action_size]


def init_linear(key, fan_in, fan_out):
    """PyTorch nn.Linear default init: U(-1/sqrt(fan_in), +1/sqrt(fan_in))."""
    kw, kb = jax.random.split(key)
    bound = 1.0 / jnp.sqrt(fan_in)
    w = jax.random.uniform(kw, (fan_in, fan_out), jnp.float32, -bound, bound)
    b = jax.random.uniform(kb, (fan_out,), jnp.float32, -bound, bound)
    return w, b


def reference_forward(x, params, param_dtype=jnp.bfloat16):
    """Pure-JAX reference mirroring the kernel numerics (bf16 MXU, f32 acc)."""
    h = x.astype(jnp.float32)
    n = len(params)
    for i, (w, b) in enumerate(params):
        z = jax.lax.dot_general(
            h.astype(param_dtype), w.astype(param_dtype),
            (((1,), (0,)), ((), ())),
            preferred_element_type=jnp.float32)
        z = z + b.reshape(1, -1).astype(jnp.float32)
        h = jnp.maximum(z, 0.0) if i < n - 1 else z
    return h


if __name__ == "__main__":
    state_size = 16
    action_size = 4

    key = jax.random.PRNGKey(0)
    k_x, k1, k2, k3, k4 = jax.random.split(key, 5)

    dims = [(state_size, 64), (64, 32), (32, 8), (8, action_size)]
    params = [init_linear(k, fi, fo)
              for k, (fi, fo) in zip([k1, k2, k3, k4], dims)]
    w_packed, b_packed = pack_qnet_params(params)

    # Small single-agent batch and a larger (non-multiple-of-tile) batch to
    # exercise both the single-tile and the tiled/padded paths.
    for batch in (8, 300):
        kx = jax.random.fold_in(k_x, batch)
        x = jax.random.normal(kx, (batch, state_size), jnp.float32)

        out = jax.block_until_ready(
            qnet_forward(x, w_packed, b_packed, action_size=action_size))
        ref = reference_forward(x, params)

        assert out.shape == (batch, action_size)
        max_diff = float(jnp.max(jnp.abs(out - ref)))
        assert jnp.allclose(out, ref, atol=1e-4, rtol=1e-4), (
            f"mismatch vs reference at batch={batch}: max |diff| = {max_diff}")

    print("KERNEL_OK")
</pallas_src>

<mosaic_0001>
module attributes {stable_mosaic.version = 11 : i64} {
  func.func @qnet_kernel(%arg0: i32, %arg1: memref<8x128xbf16, #tpu.memory_space<vmem>>, %arg2: memref<4x128x128xbf16, #tpu.memory_space<vmem>>, %arg3: memref<4x1x128xf32, #tpu.memory_space<vmem>>, %arg4: memref<8x128xf32, #tpu.memory_space<vmem>>) attributes {dimension_semantics = [#tpu.dimension_semantics<parallel>], iteration_bounds = array<i64: 1>, scalar_prefetch = 0 : i64, scratch_operands = 0 : i64, tpu.core_type = #tpu.core_type<tc>, window_params = [{transform_indices = @transform_0, window_bounds = array<i64: 8, 128>}, {pipeline_mode = #tpu.pipeline_mode<synchronous>, transform_indices = @transform_1, window_bounds = array<i64: 4, 128, 128>}, {pipeline_mode = #tpu.pipeline_mode<synchronous>, transform_indices = @transform_2, window_bounds = array<i64: 4, 1, 128>}, {transform_indices = @transform_3, window_bounds = array<i64: 8, 128>}]} {
    %c0 = arith.constant 0 : index
    %c0_0 = arith.constant 0 : index
    %0 = vector.load %arg1[%c0, %c0_0] : memref<8x128xbf16, #tpu.memory_space<vmem>>, vector<8x128xbf16>
    %c0_1 = arith.constant 0 : index
    %c0_2 = arith.constant 0 : index
    %c0_3 = arith.constant 0 : index
    %1 = vector.load %arg2[%c0_1, %c0_2, %c0_3] : memref<4x128x128xbf16, #tpu.memory_space<vmem>>, vector<1x128x128xbf16>
    %2 = vector.shape_cast %1 : vector<1x128x128xbf16> to vector<128x128xbf16>
    %cst = arith.constant dense<0.000000e+00> : vector<8x128xf32>
    %3 = tpu.matmul %0, %2, %cst {dimension_numbers = #tpu.dot_dimension_numbers<[1], [0], [0], [1], [0, 0, 1, 1], [], []>} : vector<8x128xbf16>, vector<128x128xbf16>, vector<8x128xf32> -> vector<8x128xf32>
    %c0_4 = arith.constant 0 : index
    %c0_5 = arith.constant 0 : index
    %c0_6 = arith.constant 0 : index
    %4 = vector.load %arg3[%c0_4, %c0_5, %c0_6] : memref<4x1x128xf32, #tpu.memory_space<vmem>>, vector<1x1x128xf32>
    %5 = vector.shape_cast %4 : vector<1x1x128xf32> to vector<1x128xf32>
    %6 = vector.broadcast %5 : vector<1x128xf32> to vector<8x128xf32>
    %7 = arith.addf %3, %6 : vector<8x128xf32>
    %cst_7 = arith.constant 0.000000e+00 : f32
    %8 = vector.broadcast %cst_7 : f32 to vector<8x128xf32>
    %9 = arith.maximumf %7, %8 : vector<8x128xf32>
    %10 = arith.truncf %9 : vector<8x128xf32> to vector<8x128xbf16>
    %c1 = arith.constant 1 : index
    %c0_8 = arith.constant 0 : index
    %c0_9 = arith.constant 0 : index
    %11 = vector.load %arg2[%c1, %c0_8, %c0_9] : memref<4x128x128xbf16, #tpu.memory_space<vmem>>, vector<1x128x128xbf16>
    %12 = vector.shape_cast %11 : vector<1x128x128xbf16> to vector<128x128xbf16>
    %cst_10 = arith.constant dense<0.000000e+00> : vector<8x128xf32>
    %13 = tpu.matmul %10, %12, %cst_10 {dimension_numbers = #tpu.dot_dimension_numbers<[1], [0], [0], [1], [0, 0, 1, 1], [], []>} : vector<8x128xbf16>, vector<128x128xbf16>, vector<8x128xf32> -> vector<8x128xf32>
    %c1_11 = arith.constant 1 : index
    %c0_12 = arith.constant 0 : index
    %c0_13 = arith.constant 0 : index
    %14 = vector.load %arg3[%c1_11, %c0_12, %c0_13] : memref<4x1x128xf32, #tpu.memory_space<vmem>>, vector<1x1x128xf32>
    %15 = vector.shape_cast %14 : vector<1x1x128xf32> to vector<1x128xf32>
    %16 = vector.broadcast %15 : vector<1x128xf32> to vector<8x128xf32>
    %17 = arith.addf %13, %16 : vector<8x128xf32>
    %cst_14 = arith.constant 0.000000e+00 : f32
    %18 = vector.broadcast %cst_14 : f32 to vector<8x128xf32>
    %19 = arith.maximumf %17, %18 : vector<8x128xf32>
    %20 = arith.truncf %19 : vector<8x128xf32> to vector<8x128xbf16>
    %c2 = arith.constant 2 : index
    %c0_15 = arith.constant 0 : index
    %c0_16 = arith.constant 0 : index
    %21 = vector.load %arg2[%c2, %c0_15, %c0_16] : memref<4x128x128xbf16, #tpu.memory_space<vmem>>, vector<1x128x128xbf16>
    %22 = vector.shape_cast %21 : vector<1x128x128xbf16> to vector<128x128xbf16>
    %cst_17 = arith.constant dense<0.000000e+00> : vector<8x128xf32>
    %23 = tpu.matmul %20, %22, %cst_17 {dimension_numbers = #tpu.dot_dimension_numbers<[1], [0], [0], [1], [0, 0, 1, 1], [], []>} : vector<8x128xbf16>, vector<128x128xbf16>, vector<8x128xf32> -> vector<8x128xf32>
    %c2_18 = arith.constant 2 : index
    %c0_19 = arith.constant 0 : index
    %c0_20 = arith.constant 0 : index
    %24 = vector.load %arg3[%c2_18, %c0_19, %c0_20] : memref<4x1x128xf32, #tpu.memory_space<vmem>>, vector<1x1x128xf32>
    %25 = vector.shape_cast %24 : vector<1x1x128xf32> to vector<1x128xf32>
    %26 = vector.broadcast %25 : vector<1x128xf32> to vector<8x128xf32>
    %27 = arith.addf %23, %26 : vector<8x128xf32>
    %cst_21 = arith.constant 0.000000e+00 : f32
    %28 = vector.broadcast %cst_21 : f32 to vector<8x128xf32>
    %29 = arith.maximumf %27, %28 : vector<8x128xf32>
    %30 = arith.truncf %29 : vector<8x128xf32> to vector<8x128xbf16>
    %c3 = arith.constant 3 : index
    %c0_22 = arith.constant 0 : index
    %c0_23 = arith.constant 0 : index
    %31 = vector.load %arg2[%c3, %c0_22, %c0_23] : memref<4x128x128xbf16, #tpu.memory_space<vmem>>, vector<1x128x128xbf16>
    %32 = vector.shape_cast %31 : vector<1x128x128xbf16> to vector<128x128xbf16>
    %cst_24 = arith.constant dense<0.000000e+00> : vector<8x128xf32>
    %33 = tpu.matmul %30, %32, %cst_24 {dimension_numbers = #tpu.dot_dimension_numbers<[1], [0], [0], [1], [0, 0, 1, 1], [], []>} : vector<8x128xbf16>, vector<128x128xbf16>, vector<8x128xf32> -> vector<8x128xf32>
    %c3_25 = arith.constant 3 : index
    %c0_26 = arith.constant 0 : index
    %c0_27 = arith.constant 0 : index
    %34 = vector.load %arg3[%c3_25, %c0_26, %c0_27] : memref<4x1x128xf32, #tpu.memory_space<vmem>>, vector<1x1x128xf32>
    %35 = vector.shape_cast %34 : vector<1x1x128xf32> to vector<1x128xf32>
    %36 = vector.broadcast %35 : vector<1x128xf32> to vector<8x128xf32>
    %37 = arith.addf %33, %36 : vector<8x128xf32>
    %c0_28 = arith.constant 0 : index
    %c0_29 = arith.constant 0 : index
    %38 = vector.load %arg4[%c0_28, %c0_29] : memref<8x128xf32, #tpu.memory_space<vmem>>, vector<8x128xf32>
    tpu.vector_store %arg4[%c0_28, %c0_29], %37 {strides = array<i32>} : memref<8x128xf32, #tpu.memory_space<vmem>>, vector<8x128xf32>,
    return
  }
  func.func @transform_0(%arg0: i32) -> (i32, i32) {
    %c0_i32 = arith.constant 0 : i32
    %c0_i32_0 = arith.constant 0 : i32
    return %arg0, %c0_i32 : i32, i32
  }
  func.func @transform_1(%arg0: i32) -> (i32, i32, i32) {
    %c0_i32 = arith.constant 0 : i32
    %c0_i32_0 = arith.constant 0 : i32
    %c0_i32_1 = arith.constant 0 : i32
    %c0_i32_2 = arith.constant 0 : i32
    return %c0_i32, %c0_i32_0, %c0_i32_1 : i32, i32, i32
  }
  func.func @transform_2(%arg0: i32) -> (i32, i32, i32) {
    %c0_i32 = arith.constant 0 : i32
    %c0_i32_0 = arith.constant 0 : i32
    %c0_i32_1 = arith.constant 0 : i32
    %c0_i32_2 = arith.constant 0 : i32
    return %c0_i32, %c0_i32_0, %c0_i32_1 : i32, i32, i32
  }
  func.func @transform_3(%arg0: i32) -> (i32, i32) {
    %c0_i32 = arith.constant 0 : i32
    %c0_i32_0 = arith.constant 0 : i32
    return %arg0, %c0_i32 : i32, i32
  }
}

</mosaic_0001>

<llo_original>
// kernel: qnet_forward.1
$region0: #{qnet_forward.1}
  #allocation0 [shape = 'u32[]', space=smem, size = 0x4, offset = 0x4, fixed_abs, tag = 'smem constant byte address 0x4 - core index']
  #allocation1 [shape = 'u32[72,128]{1,0:T(1,128)}', space=vmem, size = 0x9000, scoped, tag = 'internal scratch']
  %s0 = inlined_call_operand.vmem [shape: bf16[8,128], index: 0, kind: input, shape index: {}]
  %s1 = inlined_call_operand.hbm [shape: bf16[4,128,128], index: 1, kind: input, shape index: {}]
  %s2 = inlined_call_operand.vmem [shape: f32[4,1,128], index: 2, kind: input, shape index: {}]
  %s3 = inlined_call_operand.vmem [shape: f32[8,128], index: 3, kind: output, shape index: {}]
  %s4 = sld [smem:[#allocation0]]
  $region26: #{qnet_forward.1} parent=0
    _
  %s6 = ssub.s32 1, %s4
  %s7 = scalar_select 0, %s6, %s4
  $region1: #{qnet_forward.1} parent=0
    #allocation2 [shape = 'u8[131072]{0}', space=vmem, size = 0x20000, scoped, tag = 'input window, operand 1, single buffered']
    #allocation3 [shape = 's32[1]{0}', space=sflag, size = 0x4, scoped, tag = 'scoped memory for qnet_forward.1']
    %8 = vsyncpa [#allocation3], 0
    // Predicated region
    $region2: #{qnet_forward.1} parent=1 // pred_check
      _
    $region3: #{qnet_forward.1} parent=1 // pred_check_branch
      %10 = sbr.rel (0) target = $region5
    $region4: #{qnet_forward.1} parent=1 // pred_region
      _
    $region5: #{qnet_forward.1} parent=1 // pred_fallthru
      _
    // Predicated region
    $region6: #{qnet_forward.1} parent=1 // pred_check
      _
    $region7: #{qnet_forward.1} parent=1 // pred_check_branch
      %12 = sbr.rel (0) target = $region9
    $region8: #{qnet_forward.1} parent=1 // pred_region
      %14 = vsyncadd [#allocation3], 0
      %s15 = sshll.u32 %s1, 4
      %s16 = int_to_ptr.hbm [resolvable:$true] %s15
      %s17 = sshll.u32 [#allocation2], 4
      %s18 = int_to_ptr.vmem [resolvable:$true] %s17
      %23 = dma.hbm_to_vmem [thread:$0]  %s16, 4096, %s18, [#allocation3], 64, 64, 4
    $region9: #{qnet_forward.1} parent=1 // pred_fallthru
      _
    // Predicated region
    $region10: #{qnet_forward.1} parent=1 // pred_check
      _
    $region11: #{qnet_forward.1} parent=1 // pred_check_branch
      %25 = sbr.rel (0) target = $region13
    $region12: #{qnet_forward.1} parent=1 // pred_region
      _
    $region13: #{qnet_forward.1} parent=1 // pred_fallthru
      _
    // Predicated region
    $region14: #{qnet_forward.1} parent=1 // pred_check
      _
    $region15: #{qnet_forward.1} parent=1 // pred_check_branch
      %27 = sbr.rel (0) target = $region17
    $region16: #{qnet_forward.1} parent=1 // pred_region
      %29 = dma.done [#allocation3], 4096
    $region17: #{qnet_forward.1} parent=1 // pred_fallthru
      _
    %v30 = vld [vmem:[%s0] sm:$0xf]
    %v31 = vld [vmem:[#allocation2] sm:$0xf]
    %v32 = vld [vmem:[#allocation2 + $0x4] sm:$0xf]
    %v33 = vld [vmem:[#allocation2 + $0x8] sm:$0xf]
    %v34 = vld [vmem:[#allocation2 + $0xc] sm:$0xf]
    %v35 = vld [vmem:[#allocation2 + $0x10] sm:$0xf]
    %v36 = vld [vmem:[#allocation2 + $0x14] sm:$0xf]
    %v37 = vld [vmem:[#allocation2 + $0x18] sm:$0xf]
    %v38 = vld [vmem:[#allocation2 + $0x1c] sm:$0xf]
    %v39 = vld [vmem:[#allocation2 + $0x20] sm:$0xf]
    %v40 = vld [vmem:[#allocation2 + $0x24] sm:$0xf]
    %v41 = vld [vmem:[#allocation2 + $0x28] sm:$0xf]
    %v42 = vld [vmem:[#allocation2 + $0x2c] sm:$0xf]
    %v43 = vld [vmem:[#allocation2 + $0x30] sm:$0xf]
    %v44 = vld [vmem:[#allocation2 + $0x34] sm:$0xf]
    %v45 = vld [vmem:[#allocation2 + $0x38] sm:$0xf]
    %v46 = vld [vmem:[#allocation2 + $0x3c] sm:$0xf]
    %v47 = vld [vmem:[%s2] sm:$0x1]
    %v49 = vperm.slane %v47, 0
    %v67 = vunpack.c.l.b16 %v31
    %v68 = vunpack.c.l.b16 %v32
    %v69 = vunpack.c.l.b16 %v33
    %v70 = vunpack.c.l.b16 %v34
    %v71 = vunpack.c.l.b16 %v35
    %v72 = vunpack.c.l.b16 %v36
    %v73 = vunpack.c.l.b16 %v37
    %v74 = vunpack.c.l.b16 %v38
    %v75 = vunpack.c.l.b16 %v39
    %v76 = vunpack.c.l.b16 %v40
    %v77 = vunpack.c.l.b16 %v41
    %v78 = vunpack.c.l.b16 %v42
    %v79 = vunpack.c.l.b16 %v43
    %v80 = vunpack.c.l.b16 %v44
    %v81 = vunpack.c.l.b16 %v45
    %v82 = vunpack.c.l.b16 %v46
    %v83 = vpack.c.b16 %v68, %v67
    %v84 = vpack.c.b16 %v70, %v69
    %v85 = vpack.c.b16 %v72, %v71
    %v86 = vpack.c.b16 %v74, %v73
    %v87 = vpack.c.b16 %v76, %v75
    %v88 = vpack.c.b16 %v78, %v77
    %v89 = vpack.c.b16 %v80, %v79
    %v90 = vpack.c.b16 %v82, %v81
    %99 = vmatpush.bf16.msra.mxu0 %v90
    %100 = vmatpush.bf16.msra.mxu0 %v89
    %101 = vmatpush.bf16.msra.mxu0 %v88
    %102 = vmatpush.bf16.msra.mxu0 %v87
    %103 = vmatpush.bf16.msra.mxu0 %v86
    %104 = vmatpush.bf16.msra.mxu0 %v85
    %105 = vmatpush.bf16.msra.mxu0 %v84
    %106 = vmatpush.bf16.msra.mxu0 %v83
    %107 = vmatmul.bf16.gmra.mxu0 %v30
    %v108 = vpop.f32.mrf.mxu0
    %v109 = vadd.f32 %v49, %v108
    %v110 = vpop.f32.mrf.mxu0
    %111 = vdwg.mxu0
    %v112 = vmax.f32 %v109, 0.0
    %v113 = vpack.c.bf16 %v112, %v112
    %s114 = scalar_lea.vmem [#allocation2], 64
    %v115 = vld [vmem:[%s114] sm:$0xf]
    %v116 = vld [vmem:[%s114 + $0x4] sm:$0xf]
    %v117 = vld [vmem:[%s114 + $0x8] sm:$0xf]
    %v118 = vld [vmem:[%s114 + $0xc] sm:$0xf]
    %v119 = vld [vmem:[%s114 + $0x10] sm:$0xf]
    %v120 = vld [vmem:[%s114 + $0x14] sm:$0xf]
    %v121 = vld [vmem:[%s114 + $0x18] sm:$0xf]
    %v122 = vld [vmem:[%s114 + $0x1c] sm:$0xf]
    %v123 = vld [vmem:[%s114 + $0x20] sm:$0xf]
    %v124 = vld [vmem:[%s114 + $0x24] sm:$0xf]
    %v125 = vld [vmem:[%s114 + $0x28] sm:$0xf]
    %v126 = vld [vmem:[%s114 + $0x2c] sm:$0xf]
    %v127 = vld [vmem:[%s114 + $0x30] sm:$0xf]
    %v128 = vld [vmem:[%s114 + $0x34] sm:$0xf]
    %v129 = vld [vmem:[%s114 + $0x38] sm:$0xf]
    %v130 = vld [vmem:[%s114 + $0x3c] sm:$0xf]
    %s131 = scalar_lea.vmem %s2, 1
    %v132 = vld [vmem:[%s131] sm:$0x1]
    %v134 = vperm.slane %v132, 0
    %v152 = vunpack.c.l.b16 %v115
    %v153 = vunpack.c.l.b16 %v116
    %v154 = vunpack.c.l.b16 %v117
    %v155 = vunpack.c.l.b16 %v118
    %v156 = vunpack.c.l.b16 %v119
    %v157 = vunpack.c.l.b16 %v120
    %v158 = vunpack.c.l.b16 %v121
    %v159 = vunpack.c.l.b16 %v122
    %v160 = vunpack.c.l.b16 %v123
    %v161 = vunpack.c.l.b16 %v124
    %v162 = vunpack.c.l.b16 %v125
    %v163 = vunpack.c.l.b16 %v126
    %v164 = vunpack.c.l.b16 %v127
    %v165 = vunpack.c.l.b16 %v128
    %v166 = vunpack.c.l.b16 %v129
    %v167 = vunpack.c.l.b16 %v130
    %v168 = vpack.c.b16 %v153, %v152
    %v169 = vpack.c.b16 %v155, %v154
    %v170 = vpack.c.b16 %v157, %v156
    %v171 = vpack.c.b16 %v159, %v158
    %v172 = vpack.c.b16 %v161, %v160
    %v173 = vpack.c.b16 %v163, %v162
    %v174 = vpack.c.b16 %v165, %v164
    %v175 = vpack.c.b16 %v167, %v166
    %184 = vmatpush.bf16.msra.mxu0 %v175
    %185 = vmatpush.bf16.msra.mxu0 %v174
    %186 = vmatpush.bf16.msra.mxu0 %v173
    %187 = vmatpush.bf16.msra.mxu0 %v172
    %188 = vmatpush.bf16.msra.mxu0 %v171
    %189 = vmatpush.bf16.msra.mxu0 %v170
    %190 = vmatpush.bf16.msra.mxu0 %v169
    %191 = vmatpush.bf16.msra.mxu0 %v168
    %192 = vmatmul.bf16.gmra.mxu0 %v113
    %v193 = vpop.f32.mrf.mxu0
    %v194 = vadd.f32 %v134, %v193
    %v195 = vpop.f32.mrf.mxu0
    %196 = vdwg.mxu0
    %v197 = vmax.f32 %v194, 0.0
    %v198 = vpack.c.bf16 %v197, %v197
    %s199 = scalar_lea.vmem [#allocation2], 128
    %v200 = vld [vmem:[%s199] sm:$0xf]
    %v201 = vld [vmem:[%s199 + $0x4] sm:$0xf]
    %v202 = vld [vmem:[%s199 + $0x8] sm:$0xf]
    %v203 = vld [vmem:[%s199 + $0xc] sm:$0xf]
    %v204 = vld [vmem:[%s199 + $0x10] sm:$0xf]
    %v205 = vld [vmem:[%s199 + $0x14] sm:$0xf]
    %v206 = vld [vmem:[%s199 + $0x18] sm:$0xf]
    %v207 = vld [vmem:[%s199 + $0x1c] sm:$0xf]
    %v208 = vld [vmem:[%s199 + $0x20] sm:$0xf]
    %v209 = vld [vmem:[%s199 + $0x24] sm:$0xf]
    %v210 = vld [vmem:[%s199 + $0x28] sm:$0xf]
    %v211 = vld [vmem:[%s199 + $0x2c] sm:$0xf]
    %v212 = vld [vmem:[%s199 + $0x30] sm:$0xf]
    %v213 = vld [vmem:[%s199 + $0x34] sm:$0xf]
    %v214 = vld [vmem:[%s199 + $0x38] sm:$0xf]
    %v215 = vld [vmem:[%s199 + $0x3c] sm:$0xf]
    %s216 = scalar_lea.vmem %s2, 2
    %v217 = vld [vmem:[%s216] sm:$0x1]
    %v219 = vperm.slane %v217, 0
    %v237 = vunpack.c.l.b16 %v200
    %v238 = vunpack.c.l.b16 %v201
    %v239 = vunpack.c.l.b16 %v202
    %v240 = vunpack.c.l.b16 %v203
    %v241 = vunpack.c.l.b16 %v204
    %v242 = vunpack.c.l.b16 %v205
    %v243 = vunpack.c.l.b16 %v206
    %v244 = vunpack.c.l.b16 %v207
    %v245 = vunpack.c.l.b16 %v208
    %v246 = vunpack.c.l.b16 %v209
    %v247 = vunpack.c.l.b16 %v210
    %v248 = vunpack.c.l.b16 %v211
    %v249 = vunpack.c.l.b16 %v212
    %v250 = vunpack.c.l.b16 %v213
    %v251 = vunpack.c.l.b16 %v214
    %v252 = vunpack.c.l.b16 %v215
    %v253 = vpack.c.b16 %v238, %v237
    %v254 = vpack.c.b16 %v240, %v239
    %v255 = vpack.c.b16 %v242, %v241
    %v256 = vpack.c.b16 %v244, %v243
    %v257 = vpack.c.b16 %v246, %v245
    %v258 = vpack.c.b16 %v248, %v247
    %v259 = vpack.c.b16 %v250, %v249
    %v260 = vpack.c.b16 %v252, %v251
    %269 = vmatpush.bf16.msra.mxu0 %v260
    %270 = vmatpush.bf16.msra.mxu0 %v259
    %271 = vmatpush.bf16.msra.mxu0 %v258
    %272 = vmatpush.bf16.msra.mxu0 %v257
    %273 = vmatpush.bf16.msra.mxu0 %v256
    %274 = vmatpush.bf16.msra.mxu0 %v255
    %275 = vmatpush.bf16.msra.mxu0 %v254
    %276 = vmatpush.bf16.msra.mxu0 %v253
    %277 = vmatmul.bf16.gmra.mxu0 %v198
    %v278 = vpop.f32.mrf.mxu0
    %v279 = vadd.f32 %v219, %v278
    %v280 = vpop.f32.mrf.mxu0
    %281 = vdwg.mxu0
    %v282 = vmax.f32 %v279, 0.0
    %v283 = vpack.c.bf16 %v282, %v282
    %s284 = scalar_lea.vmem [#allocation2], 192
    %v285 = vld [vmem:[%s284] sm:$0xf]
    %v286 = vld [vmem:[%s284 + $0x4] sm:$0xf]
    %v287 = vld [vmem:[%s284 + $0x8] sm:$0xf]
    %v288 = vld [vmem:[%s284 + $0xc] sm:$0xf]
    %v289 = vld [vmem:[%s284 + $0x10] sm:$0xf]
    %v290 = vld [vmem:[%s284 + $0x14] sm:$0xf]
    %v291 = vld [vmem:[%s284 + $0x18] sm:$0xf]
    %v292 = vld [vmem:[%s284 + $0x1c] sm:$0xf]
    %v293 = vld [vmem:[%s284 + $0x20] sm:$0xf]
    %v294 = vld [vmem:[%s284 + $0x24] sm:$0xf]
    %v295 = vld [vmem:[%s284 + $0x28] sm:$0xf]
    %v296 = vld [vmem:[%s284 + $0x2c] sm:$0xf]
    %v297 = vld [vmem:[%s284 + $0x30] sm:$0xf]
    %v298 = vld [vmem:[%s284 + $0x34] sm:$0xf]
    %v299 = vld [vmem:[%s284 + $0x38] sm:$0xf]
    %v300 = vld [vmem:[%s284 + $0x3c] sm:$0xf]
    %s301 = scalar_lea.vmem %s2, 3
    %v302 = vld [vmem:[%s301] sm:$0x1]
    %v304 = vperm.slane %v302, 0
    %v322 = vunpack.c.l.b16 %v285
    %v323 = vunpack.c.l.b16 %v286
    %v324 = vunpack.c.l.b16 %v287
    %v325 = vunpack.c.l.b16 %v288
    %v326 = vunpack.c.l.b16 %v289
    %v327 = vunpack.c.l.b16 %v290
    %v328 = vunpack.c.l.b16 %v291
    %v329 = vunpack.c.l.b16 %v292
    %v330 = vunpack.c.l.b16 %v293
    %v331 = vunpack.c.l.b16 %v294
    %v332 = vunpack.c.l.b16 %v295
    %v333 = vunpack.c.l.b16 %v296
    %v334 = vunpack.c.l.b16 %v297
    %v335 = vunpack.c.l.b16 %v298
    %v336 = vunpack.c.l.b16 %v299
    %v337 = vunpack.c.l.b16 %v300
    %v338 = vpack.c.b16 %v323, %v322
    %v339 = vpack.c.b16 %v325, %v324
    %v340 = vpack.c.b16 %v327, %v326
    %v341 = vpack.c.b16 %v329, %v328
    %v342 = vpack.c.b16 %v331, %v330
    %v343 = vpack.c.b16 %v333, %v332
    %v344 = vpack.c.b16 %v335, %v334
    %v345 = vpack.c.b16 %v337, %v336
    %354 = vmatpush.bf16.msra.mxu0 %v345
    %355 = vmatpush.bf16.msra.mxu0 %v344
    %356 = vmatpush.bf16.msra.mxu0 %v343
    %357 = vmatpush.bf16.msra.mxu0 %v342
    %358 = vmatpush.bf16.msra.mxu0 %v341
    %359 = vmatpush.bf16.msra.mxu0 %v340
    %360 = vmatpush.bf16.msra.mxu0 %v339
    %361 = vmatpush.bf16.msra.mxu0 %v338
    %362 = vmatmul.bf16.gmra.mxu0 %v283
    %v363 = vpop.f32.mrf.mxu0
    %v364 = vadd.f32 %v304, %v363
    %v365 = vpop.f32.mrf.mxu0
    %366 = vdwg.mxu0
    %367 = vst [vmem:[%s3] sm:$0xff] %v364
    // Predicated region
    $region18: #{qnet_forward.1} parent=1 // pred_check
      _
    $region19: #{qnet_forward.1} parent=1 // pred_check_branch
      %369 = sbr.rel (0) target = $region21
    $region20: #{qnet_forward.1} parent=1 // pred_region
      _
    $region21: #{qnet_forward.1} parent=1 // pred_fallthru
      _
    // Predicated region
    $region22: #{qnet_forward.1} parent=1 // pred_check
      _
    $region23: #{qnet_forward.1} parent=1 // pred_check_branch
      %371 = sbr.rel (0) target = $region25
    $region24: #{qnet_forward.1} parent=1 // pred_region
      _
    $region25: #{qnet_forward.1} parent=1 // pred_fallthru
      _
    %372 = vsyncpa [#allocation3], 1

</llo_original>
